<compile_context>
chip_gen: v6e
topology: v6e:2x2x1
jax: 0.10.0
libtpu: 0.0.40
codegen_flags: <defaults>
</compile_context>

<pallas_src>
import numpy as np
import jax
import jax.numpy as jnp
from jax import lax
from jax.experimental import pallas as pl
from jax.experimental.pallas import tpu as pltpu

CLIP_MEAN = (0.48145466, 0.4578275, 0.40821073)
CLIP_STD = (0.26862954, 0.26130258, 0.27577711)


# ----------------------------------------------------------------------------
# Host-side glue: bicubic interpolation matrices (PyTorch convention, a=-0.75,
# align_corners=False, edge-clamped); center crop folded into the row slice.
# ----------------------------------------------------------------------------
def _cubic_weight(t, a=-0.75):
    t = abs(float(t))
    if t <= 1.0:
        return (a + 2.0) * t ** 3 - (a + 3.0) * t ** 2 + 1.0
    elif t < 2.0:
        return a * t ** 3 - 5.0 * a * t ** 2 + 8.0 * a * t - 4.0 * a
    return 0.0


def _bicubic_resize_matrix(in_size, out_size):
    W = np.zeros((out_size, in_size), dtype=np.float32)
    scale = in_size / out_size
    for o in range(out_size):
        src = (o + 0.5) * scale - 0.5
        base = int(np.floor(src))
        for k in range(-1, 3):
            idx = base + k
            w = _cubic_weight(src - idx)
            idx = min(max(idx, 0), in_size - 1)  # border replicate
            W[o, idx] += w
    return W


def _resize_geometry(s, H, W):
    # torchvision Resize([s]): shorter side -> s, aspect ratio preserved.
    if H <= W:
        new_h, new_w = s, max(int(s * W / H), 1)
    else:
        new_h, new_w = max(int(s * H / W), 1), s
    top = int(round((new_h - s) / 2.0))
    left = int(round((new_w - s) / 2.0))
    return new_h, new_w, top, left


def _vmem_capacity_bytes():
    try:
        return int(pltpu.get_tpu_info().vmem_capacity_bytes)
    except Exception:
        return 64 * 1024 * 1024  # conservative: v7x per-TensorCore VMEM


def _est_vmem_bytes(Nb, C, Hb, W, s, cbytes, obytes, multi_h):
    blk = Nb * C
    b = 2 * blk * Hb * W                      # double-buffered uint8 input
    b += 2 * blk * s * s * obytes             # double-buffered output block
    b += 2 * (Hb * s + W * s) * cbytes        # interp-matrix blocks
    b += blk * Hb * W * cbytes                # in-kernel u8 -> cdt cast
    b += blk * Hb * s * (4 + cbytes)          # xw f32 + xw cdt
    b += 2 * blk * s * s * 4                  # per-step f32 results / stack
    if multi_h:
        b += blk * s * s * 4                  # f32 accumulator scratch
    return b


def _pick_blocks(N, C, H, W, s, cbytes, obytes, budget):
    """Choose (Nb images per step, Hb rows per step)."""
    def fits(nb, hb):
        return _est_vmem_bytes(nb, C, hb, W, s, cbytes, obytes, hb < H) <= budget

    nb_cands = [d for d in range(N, 0, -1) if N % d == 0]
    if N >= 2:  # keep >= 2 grid steps so a v7x megacore gets both TCs busy
        nb_cands = [d for d in nb_cands if N // d >= 2] or [1]
    for nb in nb_cands:
        if fits(nb, H):
            return nb, H
    # Fall back to H tiling (Hb must be a multiple of 8 for clean sublane
    # collapse/slicing, or equal to H).
    h_cands = [h for h in range(H, 0, -1)
               if H % h == 0 and (h % 8 == 0 or h == H)]
    for hb in h_cands:
        if fits(1, hb):
            return 1, hb
    return 1, h_cands[-1]  # best effort


# ----------------------------------------------------------------------------
# Kernel factory.
#   y = Wh @ x @ Ww^T           (separable bicubic resize + center crop)
#   y = clamp(round(y), 0, 255) (uint8 round-trip of torchvision Resize)
#   out = y * scale[c] + bias[c]  (ConvertImageDtype + Normalize, fused)
# ----------------------------------------------------------------------------
def _make_kernel(Nb, C, Hb, W, s, n_h_steps, scale, bias, cdt):
    def resize_block(x_ref, wht_ref, wwt_ref):
        # Single cast u8 -> compute dtype (0..255 exact in bf16).
        x = x_ref[...].astype(cdt)                       # (Nb, C, Hb, W)
        wwt = wwt_ref[...]                               # (W,  s)
        wht = wht_ref[...]                               # (Hb, s)  (= Wh^T blk)
        # One big MXU matmul: M = Nb*C*Hb, K = W, N = s.
        xw = jnp.dot(x.reshape(Nb * C * Hb, W), wwt,
                     preferred_element_type=jnp.float32)
        xw = xw.reshape(Nb, C, Hb, s).astype(cdt)        # cast hoisted once
        ys = []
        for n in range(Nb):
            for c in range(C):
                # Contract the Hb (sublane) dim of both operands:
                # (Hb,s)^T-contract(Hb,s) -> (s,s), i.e. Wh_blk @ xw[n,c].
                ys.append(lax.dot_general(
                    wht, xw[n, c],
                    dimension_numbers=(((0,), (0,)), ((), ())),
                    preferred_element_type=jnp.float32))
        return ys                                        # Nb*C tensors (s, s)

    def finish(y, c):
        y = jnp.clip(jnp.round(y), 0.0, 255.0)           # uint8 round-trip
        return y * scale[c] + bias[c]                    # /255 + Normalize

    if n_h_steps == 1:
        def kernel(x_ref, wht_ref, wwt_ref, o_ref):
            ys = resize_block(x_ref, wht_ref, wwt_ref)
            outs = [finish(ys[n * C + c], c).astype(o_ref.dtype)
                    for n in range(Nb) for c in range(C)]
            # Single lane-dense store of the whole block.
            o_ref[...] = jnp.stack(outs).reshape(Nb, C, s, s)
    else:
        def kernel(x_ref, wht_ref, wwt_ref, o_ref, acc_ref):
            k = pl.program_id(1)
            ys = resize_block(x_ref, wht_ref, wwt_ref)
            y = jnp.stack(ys).reshape(Nb, C, s, s)       # f32 partial sum

            @pl.when(k == 0)
            def _():
                acc_ref[...] = y

            @pl.when(k > 0)
            def _():
                acc_ref[...] += y

            @pl.when(k == n_h_steps - 1)
            def _():
                acc = acc_ref[...]
                outs = [finish(acc[:, c], c).astype(o_ref.dtype)
                        for c in range(C)]
                o_ref[...] = jnp.stack(outs, axis=1)     # (Nb, C, s, s)

    return kernel


def make_transform(image_size, in_h, in_w, n_channels=3,
                   compute_dtype=jnp.bfloat16, out_dtype=jnp.float32,
                   max_block_bytes=None):
    s = image_size
    H, W, C = in_h, in_w, n_channels
    new_h, new_w, top, left = _resize_geometry(s, H, W)
    wh_full = _bicubic_resize_matrix(H, new_h)           # (new_h, H)
    ww_full = _bicubic_resize_matrix(W, new_w)           # (new_w, W)
    # CenterCrop(s) folded into the row slices.  wh stored transposed (H, s)
    # so the H-tiling grid axis slices its *sublane* dim (lane dim stays full).
    wh_t = jnp.asarray(wh_full[top:top + s].T, dtype=compute_dtype)    # (H, s)
    ww_t = jnp.asarray(ww_full[left:left + s].T, dtype=compute_dtype)  # (W, s)

    mean = np.asarray(CLIP_MEAN[:C], np.float32)
    std = np.asarray(CLIP_STD[:C], np.float32)
    scale = tuple(float(v) for v in (1.0 / (255.0 * std)))   # folds /255, /std
    bias = tuple(float(v) for v in (-mean / std))

    cbytes = jnp.dtype(compute_dtype).itemsize
    obytes = jnp.dtype(out_dtype).itemsize
    vmem_cap = _vmem_capacity_bytes()
    budget = max(8 << 20, min(24 << 20, vmem_cap // 3))
    if max_block_bytes is not None:
        budget = min(budget, int(max_block_bytes))

    def transform(x):
        # x: (N, C, H, W) uint8; stays uint8 across the DMA boundary.
        assert x.dtype == jnp.uint8, "expected a uint8 image batch"
        N, Cx, Hx, Wx = x.shape
        assert (Cx, Hx, Wx) == (C, H, W), "shape mismatch vs. make_transform"

        Nb, Hb = _pick_blocks(N, C, H, W, s, cbytes, obytes, budget)
        n_h = H // Hb
        multi_h = n_h > 1
        kernel = _make_kernel(Nb, C, Hb, W, s, n_h, scale, bias, compute_dtype)

        est = _est_vmem_bytes(Nb, C, Hb, W, s, cbytes, obytes, multi_h)
        # Generation-aware scoped-VMEM limit: never above ~75% of physical
        # VMEM (64 MiB/TC on v7x, 128 MiB on v5e/v6e).
        vmem_limit = int(min(int(vmem_cap * 0.75), max(2 * est, 16 << 20)))

        cost = pl.CostEstimate(
            flops=int(2 * N * C * H * s * (W + s)),
            transcendentals=0,
            bytes_accessed=int(N * C * H * W + N * C * s * s * obytes
                               + (H * s + W * s) * cbytes),
        )

        scratch = ([pltpu.VMEM((Nb, C, s, s), jnp.float32)] if multi_h else [])

        return pl.pallas_call(
            kernel,
            out_shape=jax.ShapeDtypeStruct((N, C, s, s), out_dtype),
            grid=(N // Nb, n_h),
            in_specs=[
                pl.BlockSpec((Nb, C, Hb, W), lambda n, k: (n, 0, k, 0)),
                pl.BlockSpec((Hb, s), lambda n, k: (k, 0)),
                pl.BlockSpec((W, s), lambda n, k: (0, 0)),
            ],
            out_specs=pl.BlockSpec((Nb, C, s, s), lambda n, k: (n, 0, 0, 0)),
            scratch_shapes=scratch,
            compiler_params=pltpu.CompilerParams(
                dimension_semantics=("parallel", "arbitrary"),
                vmem_limit_bytes=vmem_limit),
            cost_estimate=cost,
        )(x, wh_t, ww_t)

    return transform


# ----------------------------------------------------------------------------
# Host (numpy) reference for verification.
# ----------------------------------------------------------------------------
def _host_reference(x_u8, image_size):
    N, C, H, W = x_u8.shape
    s = image_size
    new_h, new_w, top, left = _resize_geometry(s, H, W)
    wh = _bicubic_resize_matrix(H, new_h)[top:top + s].astype(np.float64)
    ww = _bicubic_resize_matrix(W, new_w)[left:left + s].astype(np.float64)
    y = np.einsum("oh,nchw,pw->ncop", wh, x_u8.astype(np.float64), ww)
    y = np.clip(np.round(y), 0.0, 255.0) / 255.0
    mean = np.asarray(CLIP_MEAN[:C], np.float64).reshape(1, C, 1, 1)
    std = np.asarray(CLIP_STD[:C], np.float64).reshape(1, C, 1, 1)
    return (y - mean) / std


if __name__ == "__main__":
    key = jax.random.PRNGKey(0)
    N, C, H, W = 2, 3, 24, 32
    image_size = 16

    x_u8 = jax.random.randint(key, (N, C, H, W), 0, 256,
                              dtype=jnp.int32).astype(jnp.uint8)

    # Default path: bf16 weights / inputs on the MXU, f32 accumulation.
    transform = make_transform(image_size, H, W, C)
    out = jax.block_until_ready(transform(x_u8))
    assert out.shape == (N, C, image_size, image_size)
    assert out.dtype == jnp.float32
    assert bool(jnp.all(jnp.isfinite(out)))

    ref = _host_reference(np.asarray(x_u8), image_size)

    # Bit-accurate f32 path vs. host reference (atol covers a single 1/255
    # quantization flip at round-half boundaries).
    transform_f32 = make_transform(image_size, H, W, C,
                                   compute_dtype=jnp.float32)
    out_f32 = np.asarray(jax.block_until_ready(transform_f32(x_u8)))
    assert np.allclose(out_f32, ref, atol=2e-2), \
        float(np.abs(out_f32 - ref).max())

    # Force the H-tiled accumulation path (tiny VMEM budget) and re-check.
    transform_tiled = make_transform(image_size, H, W, C,
                                     compute_dtype=jnp.float32,
                                     max_block_bytes=40_000)
    out_tiled = np.asarray(jax.block_until_ready(transform_tiled(x_u8)))
    assert np.allclose(out_tiled, ref, atol=2e-2), \
        float(np.abs(out_tiled - ref).max())

    print("KERNEL_OK")
</pallas_src>

<mosaic_0001>
module attributes {stable_mosaic.version = 11 : i64} {
  func.func @kernel(%arg0: i32, %arg1: i32, %arg2: memref<1x3x24x32xi8, #tpu.memory_space<vmem>>, %arg3: memref<24x16xbf16, #tpu.memory_space<vmem>>, %arg4: memref<32x16xbf16, #tpu.memory_space<vmem>>, %arg5: memref<1x3x16x16xf32, #tpu.memory_space<vmem>>) attributes {dimension_semantics = [#tpu.dimension_semantics<parallel>, #tpu.dimension_semantics<arbitrary>], iteration_bounds = array<i64: 2, 1>, scalar_prefetch = 0 : i64, scratch_operands = 0 : i64, tpu.core_type = #tpu.core_type<tc>, window_params = [{transform_indices = @transform_0, window_bounds = array<i64: 1, 3, 24, 32>}, {transform_indices = @transform_1, window_bounds = array<i64: 24, 16>}, {pipeline_mode = #tpu.pipeline_mode<synchronous>, transform_indices = @transform_2, window_bounds = array<i64: 32, 16>}, {transform_indices = @transform_3, window_bounds = array<i64: 1, 3, 16, 16>}]} {
    %c0 = arith.constant 0 : index
    %c0_0 = arith.constant 0 : index
    %c0_1 = arith.constant 0 : index
    %c0_2 = arith.constant 0 : index
    %0 = vector.load %arg2[%c0, %c0_0, %c0_1, %c0_2] : memref<1x3x24x32xi8, #tpu.memory_space<vmem>>, vector<1x3x24x32xi8>
    %1 = arith.uitofp %0 : vector<1x3x24x32xi8> to vector<1x3x24x32xbf16>
    %c0_3 = arith.constant 0 : index
    %c0_4 = arith.constant 0 : index
    %2 = vector.load %arg4[%c0_3, %c0_4] : memref<32x16xbf16, #tpu.memory_space<vmem>>, vector<32x16xbf16>
    %c0_5 = arith.constant 0 : index
    %c0_6 = arith.constant 0 : index
    %3 = vector.load %arg3[%c0_5, %c0_6] : memref<24x16xbf16, #tpu.memory_space<vmem>>, vector<24x16xbf16>
    %4 = vector.shape_cast %1 : vector<1x3x24x32xbf16> to vector<72x32xbf16>
    %cst = arith.constant dense<0.000000e+00> : vector<72x16xf32>
    %5 = tpu.matmul %4, %2, %cst {dimension_numbers = #tpu.dot_dimension_numbers<[1], [0], [0], [1], [0, 0, 1, 1], [], []>} : vector<72x32xbf16>, vector<32x16xbf16>, vector<72x16xf32> -> vector<72x16xf32>
    %6 = vector.shape_cast %5 : vector<72x16xf32> to vector<1x3x24x16xf32>
    %7 = arith.truncf %6 : vector<1x3x24x16xf32> to vector<1x3x24x16xbf16>
    %8 = vector.extract_strided_slice %7 {offsets = [0, 0, 0, 0], sizes = [1, 1, 24, 16], strides = [1, 1, 1, 1]} : vector<1x3x24x16xbf16> to vector<1x1x24x16xbf16>
    %9 = vector.shape_cast %8 : vector<1x1x24x16xbf16> to vector<24x16xbf16>
    %cst_7 = arith.constant dense<0.000000e+00> : vector<16x16xf32>
    %10 = tpu.matmul %3, %9, %cst_7 {dimension_numbers = #tpu.dot_dimension_numbers<[0], [0], [1], [1], [0, 1, 1, 1], [], []>} : vector<24x16xbf16>, vector<24x16xbf16>, vector<16x16xf32> -> vector<16x16xf32>
    %11 = vector.extract_strided_slice %7 {offsets = [0, 1, 0, 0], sizes = [1, 1, 24, 16], strides = [1, 1, 1, 1]} : vector<1x3x24x16xbf16> to vector<1x1x24x16xbf16>
    %12 = vector.shape_cast %11 : vector<1x1x24x16xbf16> to vector<24x16xbf16>
    %cst_8 = arith.constant dense<0.000000e+00> : vector<16x16xf32>
    %13 = tpu.matmul %3, %12, %cst_8 {dimension_numbers = #tpu.dot_dimension_numbers<[0], [0], [1], [1], [0, 1, 1, 1], [], []>} : vector<24x16xbf16>, vector<24x16xbf16>, vector<16x16xf32> -> vector<16x16xf32>
    %14 = vector.extract_strided_slice %7 {offsets = [0, 2, 0, 0], sizes = [1, 1, 24, 16], strides = [1, 1, 1, 1]} : vector<1x3x24x16xbf16> to vector<1x1x24x16xbf16>
    %15 = vector.shape_cast %14 : vector<1x1x24x16xbf16> to vector<24x16xbf16>
    %cst_9 = arith.constant dense<0.000000e+00> : vector<16x16xf32>
    %16 = tpu.matmul %3, %15, %cst_9 {dimension_numbers = #tpu.dot_dimension_numbers<[0], [0], [1], [1], [0, 1, 1, 1], [], []>} : vector<24x16xbf16>, vector<24x16xbf16>, vector<16x16xf32> -> vector<16x16xf32>
    %17 = math.roundeven %10 : vector<16x16xf32>
    %cst_10 = arith.constant 0.000000e+00 : f32
    %cst_11 = arith.constant 2.550000e+02 : f32
    %18 = vector.broadcast %cst_10 : f32 to vector<16x16xf32>
    %19 = arith.maximumf %18, %17 : vector<16x16xf32>
    %20 = vector.broadcast %cst_11 : f32 to vector<16x16xf32>
    %21 = arith.minimumf %20, %19 : vector<16x16xf32>
    %cst_12 = arith.constant 0.0145984264 : f32
    %22 = vector.broadcast %cst_12 : f32 to vector<16x16xf32>
    %23 = arith.mulf %21, %22 : vector<16x16xf32>
    %cst_13 = arith.constant -1.79226255 : f32
    %24 = vector.broadcast %cst_13 : f32 to vector<16x16xf32>
    %25 = arith.addf %23, %24 : vector<16x16xf32>
    %26 = math.roundeven %13 : vector<16x16xf32>
    %cst_14 = arith.constant 0.000000e+00 : f32
    %cst_15 = arith.constant 2.550000e+02 : f32
    %27 = vector.broadcast %cst_14 : f32 to vector<16x16xf32>
    %28 = arith.maximumf %27, %26 : vector<16x16xf32>
    %29 = vector.broadcast %cst_15 : f32 to vector<16x16xf32>
    %30 = arith.minimumf %29, %28 : vector<16x16xf32>
    %cst_16 = arith.constant 0.0150077669 : f32
    %31 = vector.broadcast %cst_16 : f32 to vector<16x16xf32>
    %32 = arith.mulf %30, %31 : vector<16x16xf32>
    %cst_17 = arith.constant -1.75209713 : f32
    %33 = vector.broadcast %cst_17 : f32 to vector<16x16xf32>
    %34 = arith.addf %32, %33 : vector<16x16xf32>
    %35 = math.roundeven %16 : vector<16x16xf32>
    %cst_18 = arith.constant 0.000000e+00 : f32
    %cst_19 = arith.constant 2.550000e+02 : f32
    %36 = vector.broadcast %cst_18 : f32 to vector<16x16xf32>
    %37 = arith.maximumf %36, %35 : vector<16x16xf32>
    %38 = vector.broadcast %cst_19 : f32 to vector<16x16xf32>
    %39 = arith.minimumf %38, %37 : vector<16x16xf32>
    %cst_20 = arith.constant 0.0142200664 : f32
    %40 = vector.broadcast %cst_20 : f32 to vector<16x16xf32>
    %41 = arith.mulf %39, %40 : vector<16x16xf32>
    %cst_21 = arith.constant -1.48021984 : f32
    %42 = vector.broadcast %cst_21 : f32 to vector<16x16xf32>
    %43 = arith.addf %41, %42 : vector<16x16xf32>
    %44 = vector.shape_cast %25 : vector<16x16xf32> to vector<1x16x16xf32>
    %45 = vector.shape_cast %34 : vector<16x16xf32> to vector<1x16x16xf32>
    %46 = vector.shape_cast %43 : vector<16x16xf32> to vector<1x16x16xf32>
    %47 = tpu.concatenate %44, %45, %46 in 0 : vector<1x16x16xf32>, vector<1x16x16xf32>, vector<1x16x16xf32> -> vector<3x16x16xf32>
    %48 = vector.shape_cast %47 : vector<3x16x16xf32> to vector<1x3x16x16xf32>
    %c0_22 = arith.constant 0 : index
    %c0_23 = arith.constant 0 : index
    %c0_24 = arith.constant 0 : index
    %c0_25 = arith.constant 0 : index
    %49 = vector.load %arg5[%c0_22, %c0_23, %c0_24, %c0_25] : memref<1x3x16x16xf32, #tpu.memory_space<vmem>>, vector<1x3x16x16xf32>
    tpu.vector_store %arg5[%c0_22, %c0_23, %c0_24, %c0_25], %48 {strides = array<i32>} : memref<1x3x16x16xf32, #tpu.memory_space<vmem>>, vector<1x3x16x16xf32>,
    return
  }
  func.func @transform_0(%arg0: i32, %arg1: i32) -> (i32, i32, i32, i32) {
    %c0_i32 = arith.constant 0 : i32
    %c0_i32_0 = arith.constant 0 : i32
    %c0_i32_1 = arith.constant 0 : i32
    return %arg0, %c0_i32, %arg1, %c0_i32_0 : i32, i32, i32, i32
  }
  func.func @transform_1(%arg0: i32, %arg1: i32) -> (i32, i32) {
    %c0_i32 = arith.constant 0 : i32
    %c0_i32_0 = arith.constant 0 : i32
    return %arg1, %c0_i32 : i32, i32
  }
  func.func @transform_2(%arg0: i32, %arg1: i32) -> (i32, i32) {
    %c0_i32 = arith.constant 0 : i32
    %c0_i32_0 = arith.constant 0 : i32
    %c0_i32_1 = arith.constant 0 : i32
    return %c0_i32, %c0_i32_0 : i32, i32
  }
  func.func @transform_3(%arg0: i32, %arg1: i32) -> (i32, i32, i32, i32) {
    %c0_i32 = arith.constant 0 : i32
    %c0_i32_0 = arith.constant 0 : i32
    %c0_i32_1 = arith.constant 0 : i32
    %c0_i32_2 = arith.constant 0 : i32
    return %arg0, %c0_i32, %c0_i32_0, %c0_i32_1 : i32, i32, i32, i32
  }
}

</mosaic_0001>

<llo_original>
// kernel: tpu_custom_call.1
$region0: #{tpu_custom_call.1}
  #allocation0 [shape = 'u32[]', space=smem, size = 0x4, offset = 0x4, fixed_abs, tag = 'smem constant byte address 0x4 - core index']
  #allocation1 [shape = 'u32[144,128]{1,0:T(1,128)}', space=vmem, size = 0x12000, scoped, tag = 'internal scratch']
  %s0 = inlined_call_operand.vmem [shape: u8[2,3,24,32], index: 0, kind: input, shape index: {}]
  %s1 = inlined_call_operand.vmem [shape: bf16[24,16], index: 1, kind: input, shape index: {}]
  %s2 = inlined_call_operand.vmem [shape: bf16[32,16], index: 2, kind: input, shape index: {}]
  %s3 = inlined_call_operand.hbm [shape: f32[2,3,16,16], index: 3, kind: output, shape index: {}]
  %s4 = sld [smem:[#allocation0]]
  $region45: #{tpu_custom_call.1} parent=0
    _
  %s6 = ssub.s32 1, %s4
  %s7 = scalar_select 0, %s6, %s4
  $region1: #{tpu_custom_call.1} parent=0
    #allocation2 [shape = 'u8[49152]{0}', space=vmem, size = 0xc000, scoped, tag = 'output window, operand 0']
    #allocation3 [shape = 's32[2]{0}', space=sflag, size = 0x8, scoped, tag = 'scoped memory for tpu_custom_call.1']
    %8 = vsyncpa [#allocation3], 0
    %s9 = scalar_lea.sflag [#allocation3], 1
    %10 = vsyncpa %s9, 0
    loop: start=0, step=1, limit=4
    $region2: #{tpu_custom_call.1} parent=1 // loop_pre_header
      _
    $region3: #{tpu_custom_call.1} parent=1 // loop_header
      %s12 = sphi 0, %s16
      %p13 = scmp.ge.s32.totalorder %s12, 4
      %s19 = sphi 0, %s31
      %s20 = sphi 0, %s27
      %s21 = sphi 0, %s19
      %s22 = sphi 0, %s20
      %s23 = sphi 0, %s21
      %s24 = sphi 0, %s22
      %s36 = sphi 0, %s38
      %s39 = sphi 0, %s36
      %s40 = sphi 0, %s39
      %s56 = sphi 0, %s40
      %s62 = sphi 0, %s64
      %s65 = sphi 0, %s62
      %s66 = sphi 0, %s65
      %s82 = sphi 0, %s66
      %s86 = sphi 0, %s86
      %s88 = sphi 0, %s86
      %s89 = sphi 0, %s88
      %s103 = sphi 0, %s89
      %s109 = sphi 0, %s111
      %s112 = sphi 0, %s109
      %s113 = sphi 0, %s112
      %s129 = sphi 0, %s113
    $region4: #{tpu_custom_call.1} parent=1 // loop_header_branch
      %15 = sbr.rel (%p13) target = $region8
    $region5: #{tpu_custom_call.1} parent=1 // loop_body
      %s17 = ssub.s32 %s12, 1
      %s18 = ssub.s32 %s12, 2
      %s25 = sadd.s32 1, %s20
      %p26 = scmp.ge.s32.totalorder %s25, 1
      %s27 = scalar_select %p26, 0, %s25
      %s28 = sadd.s32 1, %s19
      %s29 = scalar_select %p26, %s28, %s19
      %p30 = scmp.ge.s32.totalorder %s29, 2
      %s31 = scalar_select %p30, 0, %s29
      %s32 = ssub.s32 %s19, %s31
      %s33 = ssub.s32 %s20, %s27
      %s34 = sor.u32 %s32, %s33
      %p35 = scmp.eq.s32.totalorder %s34, 0
      %s37 = sadd.s32 %s36, 1
      %s38 = scalar_select %p35, %s36, %s37
      %p41 = pneg %p35
      %p42 = scmp.eq.s32.totalorder %s12, 1
      %p43 = por %p41, %p42
      %p44 = scmp.ne.s32.totalorder %s36, %s39
      %p45 = scmp.eq.s32.totalorder %s12, 0
      %p46 = por %p44, %p45
      %p47 = scmp.ne.s32.totalorder %s36, %s39
      %p48 = scmp.eq.s32.totalorder %s17, 1
      %p49 = por %p47, %p48
      %p50 = scmp.ne.s32.totalorder %s39, %s40
      %p51 = scmp.eq.s32.totalorder %s17, 0
      %p52 = por %p50, %p51
      %p53 = scmp.ne.s32.totalorder %s39, %s40
      %p54 = scmp.eq.s32.totalorder %s18, 1
      %p55 = por %p53, %p54
      %p57 = scmp.ne.s32.totalorder %s40, %s56
      %p58 = scmp.eq.s32.totalorder %s18, 0
      %p59 = por %p57, %p58
      %s60 = ssub.s32 %s20, %s27
      %p61 = scmp.eq.s32.totalorder %s60, 0
      %s63 = sadd.s32 %s62, 1
      %s64 = scalar_select %p61, %s62, %s63
      %p67 = pneg %p61
      %p68 = scmp.eq.s32.totalorder %s12, 1
      %p69 = por %p67, %p68
      %p70 = scmp.ne.s32.totalorder %s62, %s65
      %p71 = scmp.eq.s32.totalorder %s12, 0
      %p72 = por %p70, %p71
      %p73 = scmp.ne.s32.totalorder %s62, %s65
      %p74 = scmp.eq.s32.totalorder %s17, 1
      %p75 = por %p73, %p74
      %p76 = scmp.ne.s32.totalorder %s65, %s66
      %p77 = scmp.eq.s32.totalorder %s17, 0
      %p78 = por %p76, %p77
      %p79 = scmp.ne.s32.totalorder %s65, %s66
      %p80 = scmp.eq.s32.totalorder %s18, 1
      %p81 = por %p79, %p80
      %p83 = scmp.ne.s32.totalorder %s66, %s82
      %p84 = scmp.eq.s32.totalorder %s18, 0
      %p85 = por %p83, %p84
      %s87 = sadd.s32 %s86, 1
      %p90 = scmp.eq.s32.totalorder %s12, 1
      %p91 = scmp.ne.s32.totalorder %s86, %s88
      %p92 = scmp.eq.s32.totalorder %s12, 0
      %p93 = por %p91, %p92
      %p94 = scmp.ne.s32.totalorder %s86, %s88
      %p95 = scmp.eq.s32.totalorder %s17, 1
      %p96 = por %p94, %p95
      %p97 = scmp.ne.s32.totalorder %s88, %s89
      %p98 = scmp.eq.s32.totalorder %s17, 0
      %p99 = por %p97, %p98
      %p100 = scmp.ne.s32.totalorder %s88, %s89
      %p101 = scmp.eq.s32.totalorder %s18, 1
      %p102 = por %p100, %p101
      %p104 = scmp.ne.s32.totalorder %s89, %s103
      %p105 = scmp.eq.s32.totalorder %s18, 0
      %p106 = por %p104, %p105
      %s107 = ssub.s32 %s19, %s31
      %p108 = scmp.eq.s32.totalorder %s107, 0
      %s110 = sadd.s32 %s109, 1
      %s111 = scalar_select %p108, %s109, %s110
      %p114 = pneg %p108
      %p115 = scmp.eq.s32.totalorder %s12, 1
      %p116 = por %p114, %p115
      %p117 = scmp.ne.s32.totalorder %s109, %s112
      %p118 = scmp.eq.s32.totalorder %s12, 0
      %p119 = por %p117, %p118
      %p120 = scmp.ne.s32.totalorder %s109, %s112
      %p121 = scmp.eq.s32.totalorder %s17, 1
      %p122 = por %p120, %p121
      %p123 = scmp.ne.s32.totalorder %s112, %s113
      %p124 = scmp.eq.s32.totalorder %s17, 0
      %p125 = por %p123, %p124
      %p126 = scmp.ne.s32.totalorder %s112, %s113
      %p127 = scmp.eq.s32.totalorder %s18, 1
      %p128 = por %p126, %p127
      %p130 = scmp.ne.s32.totalorder %s113, %s129
      %p131 = scmp.eq.s32.totalorder %s18, 0
      %p132 = por %p130, %p131
      %p133 = scmp.le.s32.totalorder 1, %s12
      %p134 = scmp.lt.s32.totalorder %s12, 3
      %p135 = pnand %p133, %p134
      %p136 = pneg %p135
      // Predicated region
      $region9: #{tpu_custom_call.1} parent=5 // pred_check
        _
      $region10: #{tpu_custom_call.1} parent=5 // pred_check_branch
        %138 = sbr.rel (%p135) target = $region12
      $region11: #{tpu_custom_call.1} parent=5 // pred_region
        %s139 = ssub.s32 %s12, 1
        // Predicated region
        $region13: #{tpu_custom_call.1} parent=11 // pred_check
          %p140 = pneg %p78
        $region14: #{tpu_custom_call.1} parent=11 // pred_check_branch
          %142 = sbr.rel (%p140) target = $region16
        $region15: #{tpu_custom_call.1} parent=11 // pred_region
          %s143 = smul.u32 3, %s22
          %p144 = scmp.lt.s32.totalorder %s143, 2
          %s145 = scalar_select %p144, %s143, 2
          %s146 = smul.addr %s145, 4
          %s147 = scalar_lea.vmem %s1, %s146
          %s148 = smul.u32 3, %s22
        $region16: #{tpu_custom_call.1} parent=11 // pred_fallthru
          _
        // Predicated region
        $region17: #{tpu_custom_call.1} parent=11 // pred_check
          %p149 = pneg %p99
        $region18: #{tpu_custom_call.1} parent=11 // pred_check_branch
          %151 = sbr.rel (%p149) target = $region20
        $region19: #{tpu_custom_call.1} parent=11 // pred_region
          _
        $region20: #{tpu_custom_call.1} parent=11 // pred_fallthru
          _
      $region12: #{tpu_custom_call.1} parent=5 // pred_fallthru
        _
      %p152 = scmp.lt.s32.totalorder %s12, 2
      // Predicated region
      $region21: #{tpu_custom_call.1} parent=5 // pred_check
        %p153 = pneg %p152
      $region22: #{tpu_custom_call.1} parent=5 // pred_check_branch
        %155 = sbr.rel (%p153) target = $region24
      $region23: #{tpu_custom_call.1} parent=5 // pred_region
        // Predicated region
        $region25: #{tpu_custom_call.1} parent=23 // pred_check
          %p156 = pneg %p46
        $region26: #{tpu_custom_call.1} parent=23 // pred_check_branch
          %158 = sbr.rel (%p156) target = $region28
        $region27: #{tpu_custom_call.1} parent=23 // pred_region
          %s159 = smul.u32 3, %s20
          %p160 = scmp.lt.s32.totalorder %s19, 1
          %s161 = scalar_select %p160, %s19, 1
          %p162 = scmp.lt.s32.totalorder %s159, 2
          %s163 = scalar_select %p162, %s159, 2
          %s164 = smul.addr %s161, 9
          %s165 = sadd.s32 %s163, %s164
          %s166 = smul.addr %s165, 2
          %s167 = scalar_lea.vmem %s0, %s166
          %s168 = smul.u32 3, %s20
        $region28: #{tpu_custom_call.1} parent=23 // pred_fallthru
          _
      $region24: #{tpu_custom_call.1} parent=5 // pred_fallthru
        _
      %p169 = scmp.le.s32.totalorder 1, %s12
      %p170 = scmp.lt.s32.totalorder %s12, 3
      %p171 = pnand %p169, %p170
      %p172 = pneg %p171
      // Predicated region
      $region29: #{tpu_custom_call.1} parent=5 // pred_check
        _
      $region30: #{tpu_custom_call.1} parent=5 // pred_check_branch
        %174 = sbr.rel (%p171) target = $region32
      $region31: #{tpu_custom_call.1} parent=5 // pred_region
        %s175 = ssub.s32 %s12, 1
        %s176 = smul.u32 3, %s22
        %p177 = scmp.lt.s32.totalorder %s21, 1
        %s178 = scalar_select %p177, %s21, 1
        %p179 = scmp.lt.s32.totalorder %s176, 2
        %s180 = scalar_select %p179, %s176, 2
        %s181 = smul.addr %s178, 9
        %s182 = sadd.s32 %s180, %s181
        %s183 = smul.addr %s182, 2
        %s184 = scalar_lea.vmem %s0, %s183
        %p185 = pneg %p52
        %p186 = pneg %p49
        %s187 = smul.u32 3, %s22
        %p188 = scmp.lt.s32.totalorder %s187, 2
        %s189 = scalar_select %p188, %s187, 2
        %s190 = smul.addr %s189, 4
        %s191 = scalar_lea.vmem %s1, %s190
        %p192 = pneg %p78
        %p193 = pneg %p75
        %p194 = pneg %p99
        %p195 = pneg %p96
        %p196 = pneg %p125
        %p197 = pneg %p122
        %s198 = sand.u32 %s112, 1
        %s199 = scalar_lea.sflag [#allocation3], %s198
        %s200 = sand.u32 %s112, 1
        %s201 = smul.addr %s200, 48
        %s202 = scalar_lea.vmem [#allocation2], %s201
        %s203 = smul.u32 3, %s22
        %p204 = scmp.lt.s32.totalorder %s21, 1
        %s205 = scalar_select %p204, %s21, 1
        %p206 = scmp.lt.s32.totalorder %s203, 2
        %s207 = scalar_select %p206, %s203, 2
        %s208 = smul.addr %s205, 9
        %s209 = sadd.s32 %s207, %s208
        %s210 = smul.addr %s209, 2
        %s211 = scalar_lea.vmem %s0, %s210
        %s212 = smul.u32 3, %s22
        %s213 = smul.u32 3, %s22
        %p214 = scmp.lt.s32.totalorder %s213, 2
        %s215 = scalar_select %p214, %s213, 2
        %s216 = smul.addr %s215, 4
        %s217 = scalar_lea.vmem %s1, %s216
        %s218 = smul.u32 3, %s22
        %v220 = vld [vmem:[%s211] sm:$0x3]
        %v221 = vld [vmem:[%s211 + $0x2] sm:$0x3]
        %v222 = vld [vmem:[%s211 + $0x4] sm:$0x3]
        %v223 = vld [vmem:[%s211 + $0x6] sm:$0x3]
        %v224 = vld [vmem:[%s211 + $0x8] sm:$0x3]
        %v225 = vld [vmem:[%s211 + $0xa] sm:$0x3]
        %v226 = vld [vmem:[%s211 + $0xc] sm:$0x3]
        %v227 = vld [vmem:[%s211 + $0xe] sm:$0x3]
        %v228 = vld [vmem:[%s211 + $0x10] sm:$0x3]
        %v229 = vunpack.c.l.u8.bf16 %v220
        %v230 = vunpack.c.l.u8.bf16 %v221
        %v231 = vunpack.c.l.u8.bf16 %v222
        %v232 = vunpack.c.l.u8.bf16 %v223
        %v233 = vunpack.c.l.u8.bf16 %v224
        %v234 = vunpack.c.l.u8.bf16 %v225
        %v235 = vunpack.c.l.u8.bf16 %v226
        %v236 = vunpack.c.l.u8.bf16 %v227
        %v237 = vunpack.c.l.u8.bf16 %v228
        %v238 = vld [vmem:[%s2] sm:$0xf]
        %v239 = vld [vmem:[%s2 + $0x4] sm:$0xf]
        %v240 = vld [vmem:[%s2 + $0x8] sm:$0xf]
        %v241 = vld [vmem:[%s2 + $0xc] sm:$0xf]
        %v242 = vld [vmem:[%s217] sm:$0xf]
        %v243 = vld [vmem:[%s217 + $0x4] sm:$0xf]
        %v244 = vld [vmem:[%s217 + $0x8] sm:$0xf]
        %v254 = vunpack.c.l.b16 %v229
        %v255 = vunpack.c.l.b16 %v230
        %v256 = vunpack.c.l.b16 %v231
        %v257 = vunpack.c.l.b16 %v232
        %v258 = vunpack.c.l.b16 %v233
        %v259 = vunpack.c.l.b16 %v234
        %v260 = vunpack.c.l.b16 %v235
        %v261 = vunpack.c.l.b16 %v236
        %v262 = vunpack.c.l.b16 %v237
        %v263 = vpack.c.b16 %v255, %v254
        %v264 = vpack.c.b16 %v257, %v256
        %v265 = vpack.c.b16 %v259, %v258
        %v266 = vpack.c.b16 %v261, %v260
        %v267 = vpack.c.b16 %v262, %v262
        %v272 = vunpack.c.l.b16 %v238
        %v273 = vunpack.c.l.b16 %v239
        %v274 = vunpack.c.l.b16 %v240
        %v275 = vunpack.c.l.b16 %v241
        %v276 = vpack.c.b16 %v273, %v272
        %v277 = vpack.c.b16 %v275, %v274
        %vm280 = vcmask 261120
        %v282 = vsel %vm280, %v263, 0
        %v285 = vsel %vm280, %v264, 0
        %v288 = vsel %vm280, %v265, 0
        %v291 = vsel %vm280, %v266, 0
        %v294 = vsel %vm280, %v267, 0
        %296 = vmatprep.subr.bf16.mxu0 0
        %297 = vmatpush1.bf16.msra.mxu0 0
        %298 = vmatprep.subr.bf16.mxu0 0
        %299 = vmatpush1.bf16.msra.mxu0 0
        %300 = vmatprep.subr.bf16.mxu0 0
        %301 = vmatpush1.bf16.msra.mxu0 0
        %302 = vmatprep.subr.bf16.mxu0 0
        %303 = vmatpush1.bf16.msra.mxu0 0
        %304 = vmatprep.subr.bf16.mxu0 0
        %305 = vmatpush1.bf16.msra.mxu0 0
        %306 = vmatprep.subr.bf16.mxu0 0
        %307 = vmatpush1.bf16.msra.mxu0 0
        %308 = vmatprep.subr.bf16.mxu0 0
        %309 = vmatpush1.bf16.msra.mxu0 %v277
        %310 = vmatprep.subr.bf16.mxu0 0
        %311 = vmatpush1.bf16.msra.mxu0 %v276
        %312 = vmatprep.subr.bf16.mxu0 0
        %313 = vmatpush2.bf16.msra.mxu0 0
        %314 = vmatprep.subr.bf16.mxu0 0
        %315 = vmatpush2.bf16.msra.mxu0 0
        %316 = vmatprep.subr.bf16.mxu0 0
        %317 = vmatpush2.bf16.msra.mxu0 0
        %318 = vmatprep.subr.bf16.mxu0 0
        %319 = vmatpush2.bf16.msra.mxu0 0
        %320 = vmatprep.subr.bf16.mxu0 0
        %321 = vmatpush2.bf16.msra.mxu0 0
        %322 = vmatprep.subr.bf16.mxu0 0
        %323 = vmatpush2.bf16.msra.mxu0 0
        %324 = vmatprep.subr.bf16.mxu0 0
        %325 = vmatpush2.bf16.msra.mxu0 0
        %326 = vmatprep.subr.bf16.mxu0 0
        %327 = vmatpush2.bf16.msra.mxu0 0
        %328 = vmatprep.mubr.bf16.mxu0 0
        %329 = vmatmul.mubr.bf16.gmra.mxu0 %v282
        %v330 = vpop.f32.mrf.mxu0
        %v331 = vadd.f32 0.0, %v330
        %v332 = vpop.f32.mrf.mxu0
        %v333 = vpop.f32.mrf.mxu0
        %v334 = vadd.f32 0.0, %v333
        %v335 = vpop.f32.mrf.mxu0
        %336 = vmatprep.mubr.bf16.mxu0 0
        %337 = vmatmul.mubr.bf16.gmra.mxu0 %v285
        %v338 = vpop.f32.mrf.mxu0
        %v339 = vadd.f32 0.0, %v338
        %v340 = vpop.f32.mrf.mxu0
        %v341 = vpop.f32.mrf.mxu0
        %v342 = vadd.f32 0.0, %v341
        %v343 = vpop.f32.mrf.mxu0
        %344 = vmatprep.mubr.bf16.mxu0 0
        %345 = vmatmul.mubr.bf16.gmra.mxu0 %v288
        %v346 = vpop.f32.mrf.mxu0
        %v347 = vadd.f32 0.0, %v346
        %v348 = vpop.f32.mrf.mxu0
        %v349 = vpop.f32.mrf.mxu0
        %v350 = vadd.f32 0.0, %v349
        %v351 = vpop.f32.mrf.mxu0
        %352 = vmatprep.mubr.bf16.mxu0 0
        %353 = vmatmul.mubr.bf16.gmra.mxu0 %v291
        %v354 = vpop.f32.mrf.mxu0
        %v355 = vadd.f32 0.0, %v354
        %v356 = vpop.f32.mrf.mxu0
        %v357 = vpop.f32.mrf.mxu0
        %v358 = vadd.f32 0.0, %v357
        %v359 = vpop.f32.mrf.mxu0
        %360 = vmatprep.mubr.bf16.mxu0 0
        %361 = vmatmul.mubr.bf16.gmra.mxu0 %v294
        %v362 = vpop.f32.mrf.mxu0
        %v363 = vadd.f32 0.0, %v362
        %v364 = vpop.f32.mrf.mxu0
        %v365 = vpop.f32.mrf.mxu0
        %v366 = vpop.f32.mrf.mxu0
        %367 = vdwg.mxu0
        %v368 = vpack.c.bf16 %v334, %v331
        %v369 = vpack.c.bf16 %v339, %v339
        %v370 = vpack.c.bf16 %v347, %v342
        %v371 = vpack.c.bf16 %v350, %v350
        %v372 = vpack.c.bf16 %v358, %v355
        %v373 = vpack.c.bf16 %v363, %v363
        %v377 = vunpack.c.l.b16 %v242
        %v378 = vunpack.c.l.b16 %v243
        %v379 = vunpack.c.l.b16 %v244
        %v380 = vpack.c.b16 %v378, %v377
        %v381 = vpack.c.b16 %v379, %v379
        %384 = vxpose.xlu0.c.b16.start [1/8] %v380, 128
        %385 = vxpose.xlu0.c.b16.cont [2/8] %v381, 128
        %386 = vxpose.xlu0.c.b16.cont [3/8] 0, 128
        %387 = vxpose.xlu0.c.b16.cont [4/8] 0, 128
        %388 = vxpose.xlu0.c.b16.cont [5/8] 0, 128
        %389 = vxpose.xlu0.c.b16.cont [6/8] 0, 128
        %390 = vxpose.xlu0.c.b16.cont [7/8] 0, 128
        %391 = vxpose.xlu0.c.b16.end [8/8] 0, 128
        %v392 = vpop.trf.xlu0
        %v393 = vpop.trf.xlu0
        %v394 = vpop.trf.xlu0
        %v395 = vpop.trf.xlu0
        %v396 = vpop.trf.xlu0
        %v397 = vpop.trf.xlu0
        %v398 = vpop.trf.xlu0
        %v399 = vpop.trf.xlu0
        %vm400 = vcmask 195584
        %v402 = vsel %vm400, %v392, 0
        %vm404 = vcmask 1043456
        %v406 = vsel %vm404, %v369, 0
        %408 = vmatprep.subr.bf16.mxu0 0
        %409 = vmatpush1.bf16.msra.mxu0 0
        %410 = vmatprep.subr.bf16.mxu0 0
        %411 = vmatpush1.bf16.msra.mxu0 0
        %412 = vmatprep.subr.bf16.mxu0 0
        %413 = vmatpush1.bf16.msra.mxu0 0
        %414 = vmatprep.subr.bf16.mxu0 0
        %415 = vmatpush1.bf16.msra.mxu0 0
        %416 = vmatprep.subr.bf16.mxu0 0
        %417 = vmatpush1.bf16.msra.mxu0 0
        %418 = vmatprep.subr.bf16.mxu0 0
        %419 = vmatpush1.bf16.msra.mxu0 0
        %420 = vmatprep.subr.bf16.mxu0 0
        %421 = vmatpush1.bf16.msra.mxu0 %v406
        %422 = vmatprep.subr.bf16.mxu0 0
        %423 = vmatpush1.bf16.msra.mxu0 %v368
        %424 = vmatprep.subr.bf16.mxu0 0
        %425 = vmatpush2.bf16.msra.mxu0 0
        %426 = vmatprep.subr.bf16.mxu0 0
        %427 = vmatpush2.bf16.msra.mxu0 0
        %428 = vmatprep.subr.bf16.mxu0 0
        %429 = vmatpush2.bf16.msra.mxu0 0
        %430 = vmatprep.subr.bf16.mxu0 0
        %431 = vmatpush2.bf16.msra.mxu0 0
        %432 = vmatprep.subr.bf16.mxu0 0
        %433 = vmatpush2.bf16.msra.mxu0 0
        %434 = vmatprep.subr.bf16.mxu0 0
        %435 = vmatpush2.bf16.msra.mxu0 0
        %436 = vmatprep.subr.bf16.mxu0 0
        %437 = vmatpush2.bf16.msra.mxu0 0
        %438 = vmatprep.subr.bf16.mxu0 0
        %439 = vmatpush2.bf16.msra.mxu0 0
        %440 = vmatprep.mubr.bf16.mxu0 0
        %441 = vmatmul.mubr.bf16.gmra.mxu0 %v402
        %v442 = vpop.f32.mrf.mxu0
        %v443 = vadd.f32 0.0, %v442
        %v444 = vpop.f32.mrf.mxu0
        %v445 = vpop.f32.mrf.mxu0
        %v446 = vadd.f32 0.0, %v445
        %v447 = vpop.f32.mrf.mxu0
        %448 = vdwg.mxu0
        %v450 = vsel %vm404, %v371, 0
        %452 = vmatprep.subr.bf16.mxu0 0
        %453 = vmatpush1.bf16.msra.mxu0 0
        %454 = vmatprep.subr.bf16.mxu0 0
        %455 = vmatpush1.bf16.msra.mxu0 0
        %456 = vmatprep.subr.bf16.mxu0 0
        %457 = vmatpush1.bf16.msra.mxu0 0
        %458 = vmatprep.subr.bf16.mxu0 0
        %459 = vmatpush1.bf16.msra.mxu0 0
        %460 = vmatprep.subr.bf16.mxu0 0
        %461 = vmatpush1.bf16.msra.mxu0 0
        %462 = vmatprep.subr.bf16.mxu0 0
        %463 = vmatpush1.bf16.msra.mxu0 0
        %464 = vmatprep.subr.bf16.mxu0 0
        %465 = vmatpush1.bf16.msra.mxu0 %v450
        %466 = vmatprep.subr.bf16.mxu0 0
        %467 = vmatpush1.bf16.msra.mxu0 %v370
        %468 = vmatprep.subr.bf16.mxu0 0
        %469 = vmatpush2.bf16.msra.mxu0 0
        %470 = vmatprep.subr.bf16.mxu0 0
        %471 = vmatpush2.bf16.msra.mxu0 0
        %472 = vmatprep.subr.bf16.mxu0 0
        %473 = vmatpush2.bf16.msra.mxu0 0
        %474 = vmatprep.subr.bf16.mxu0 0
        %475 = vmatpush2.bf16.msra.mxu0 0
        %476 = vmatprep.subr.bf16.mxu0 0
        %477 = vmatpush2.bf16.msra.mxu0 0
        %478 = vmatprep.subr.bf16.mxu0 0
        %479 = vmatpush2.bf16.msra.mxu0 0
        %480 = vmatprep.subr.bf16.mxu0 0
        %481 = vmatpush2.bf16.msra.mxu0 0
        %482 = vmatprep.subr.bf16.mxu0 0
        %483 = vmatpush2.bf16.msra.mxu0 0
        %484 = vmatprep.mubr.bf16.mxu0 0
        %485 = vmatmul.mubr.bf16.gmra.mxu0 %v402
        %v486 = vpop.f32.mrf.mxu0
        %v487 = vadd.f32 0.0, %v486
        %v488 = vpop.f32.mrf.mxu0
        %v489 = vpop.f32.mrf.mxu0
        %v490 = vadd.f32 0.0, %v489
        %v491 = vpop.f32.mrf.mxu0
        %492 = vdwg.mxu0
        %v494 = vsel %vm404, %v373, 0
        %496 = vmatprep.subr.bf16.mxu0 0
        %497 = vmatpush1.bf16.msra.mxu0 0
        %498 = vmatprep.subr.bf16.mxu0 0
        %499 = vmatpush1.bf16.msra.mxu0 0
        %500 = vmatprep.subr.bf16.mxu0 0
        %501 = vmatpush1.bf16.msra.mxu0 0
        %502 = vmatprep.subr.bf16.mxu0 0
        %503 = vmatpush1.bf16.msra.mxu0 0
        %504 = vmatprep.subr.bf16.mxu0 0
        %505 = vmatpush1.bf16.msra.mxu0 0
        %506 = vmatprep.subr.bf16.mxu0 0
        %507 = vmatpush1.bf16.msra.mxu0 0
        %508 = vmatprep.subr.bf16.mxu0 0
        %509 = vmatpush1.bf16.msra.mxu0 %v494
        %510 = vmatprep.subr.bf16.mxu0 0
        %511 = vmatpush1.bf16.msra.mxu0 %v372
        %512 = vmatprep.subr.bf16.mxu0 0
        %513 = vmatpush2.bf16.msra.mxu0 0
        %514 = vmatprep.subr.bf16.mxu0 0
        %515 = vmatpush2.bf16.msra.mxu0 0
        %516 = vmatprep.subr.bf16.mxu0 0
        %517 = vmatpush2.bf16.msra.mxu0 0
        %518 = vmatprep.subr.bf16.mxu0 0
        %519 = vmatpush2.bf16.msra.mxu0 0
        %520 = vmatprep.subr.bf16.mxu0 0
        %521 = vmatpush2.bf16.msra.mxu0 0
        %522 = vmatprep.subr.bf16.mxu0 0
        %523 = vmatpush2.bf16.msra.mxu0 0
        %524 = vmatprep.subr.bf16.mxu0 0
        %525 = vmatpush2.bf16.msra.mxu0 0
        %526 = vmatprep.subr.bf16.mxu0 0
        %527 = vmatpush2.bf16.msra.mxu0 0
        %528 = vmatprep.mubr.bf16.mxu0 0
        %529 = vmatmul.mubr.bf16.gmra.mxu0 %v402
        %v530 = vpop.f32.mrf.mxu0
        %v531 = vadd.f32 0.0, %v530
        %v532 = vpop.f32.mrf.mxu0
        %v533 = vpop.f32.mrf.mxu0
        %v534 = vadd.f32 0.0, %v533
        %v535 = vpop.f32.mrf.mxu0
        %536 = vdwg.mxu0
        %v537 = vround.ne.pseudo %v443
        %v538 = vround.ne.pseudo %v446
        %v539 = vmax.f32 %v537, 0.0
        %v540 = vmax.f32 %v538, 0.0
        %v541 = vmin.f32 %v539, 255.0
        %v542 = vmin.f32 %v540, 255.0
        %v543 = vmul.f32 %v541, 0.014598426
        %v544 = vmul.f32 %v542, 0.014598426
        %v545 = vadd.f32 %v543, -1.7922626
        %v546 = vadd.f32 %v544, -1.7922626
        %v547 = vround.ne.pseudo %v487
        %v548 = vround.ne.pseudo %v490
        %v549 = vmax.f32 %v547, 0.0
        %v550 = vmax.f32 %v548, 0.0
        %v551 = vmin.f32 %v549, 255.0
        %v552 = vmin.f32 %v550, 255.0
        %v553 = vmul.f32 %v551, 0.015007767
        %v554 = vmul.f32 %v552, 0.015007767
        %v555 = vadd.f32 %v553, -1.7520971
        %v556 = vadd.f32 %v554, -1.7520971
        %v557 = vround.ne.pseudo %v531
        %v558 = vround.ne.pseudo %v534
        %v559 = vmax.f32 %v557, 0.0
        %v560 = vmax.f32 %v558, 0.0
        %v561 = vmin.f32 %v559, 255.0
        %v562 = vmin.f32 %v560, 255.0
        %v563 = vmul.f32 %v561, 0.014220066
        %v564 = vmul.f32 %v562, 0.014220066
        %v565 = vadd.f32 %v563, -1.4802198
        %v566 = vadd.f32 %v564, -1.4802198
        %vm567 = vcmask 130048
        %568 = vst.msk [vmem:[%s202] sm:$0xff] %vm567, %v545
        %569 = vst.msk [vmem:[%s202 + $0x8] sm:$0xff] %vm567, %v546
        %570 = vst.msk [vmem:[%s202 + $0x10] sm:$0xff] %vm567, %v555
        %571 = vst.msk [vmem:[%s202 + $0x18] sm:$0xff] %vm567, %v556
        %572 = vst.msk [vmem:[%s202 + $0x20] sm:$0xff] %vm567, %v565
        %573 = vst.msk [vmem:[%s202 + $0x28] sm:$0xff] %vm567, %v566
        %s574 = sand.u32 %s112, 1
        %s575 = scalar_lea.sflag [#allocation3], %s574
        %s576 = sand.u32 %s112, 1
        %s577 = smul.addr %s576, 48
        %s578 = scalar_lea.vmem [#allocation2], %s577
        // Predicated region
        $region33: #{tpu_custom_call.1} parent=31 // pred_check
          %p579 = pneg %p122
        $region34: #{tpu_custom_call.1} parent=31 // pred_check_branch
          %581 = sbr.rel (%p579) target = $region36
        $region35: #{tpu_custom_call.1} parent=31 // pred_region
          %s583 = ssub.s32 768, 768
          %584 = vsyncadd %s575, %s583
          %s585 = smul.addr %s21, 6
          %s586 = smul.addr %s585, 128
          %s587 = scalar_lea.hbm %s3, %s586
          %s588 = sshll.u32 %s578, 4
          %s589 = int_to_ptr.vmem [resolvable:$true] %s588
          %594 = dma.vmem_to_hbm [thread:$0]  %s589, 768, %s587, %s575, 128, 128, 8
        $region36: #{tpu_custom_call.1} parent=31 // pred_fallthru
          _
      $region32: #{tpu_custom_call.1} parent=5 // pred_fallthru
        _
      %p595 = scmp.le.s32.totalorder 2, %s12
      // Predicated region
      $region37: #{tpu_custom_call.1} parent=5 // pred_check
        %p596 = pneg %p595
      $region38: #{tpu_custom_call.1} parent=5 // pred_check_branch
        %598 = sbr.rel (%p596) target = $region40
      $region39: #{tpu_custom_call.1} parent=5 // pred_region
        %s599 = ssub.s32 %s12, 2
        // Predicated region
        $region41: #{tpu_custom_call.1} parent=39 // pred_check
          %p600 = pneg %p128
        $region42: #{tpu_custom_call.1} parent=39 // pred_check_branch
          %602 = sbr.rel (%p600) target = $region44
        $region43: #{tpu_custom_call.1} parent=39 // pred_region
          %s603 = sand.u32 %s113, 1
          %s604 = scalar_lea.sflag [#allocation3], %s603
          %s605 = sand.u32 %s113, 1
          %s606 = smul.addr %s605, 48
          %s607 = scalar_lea.vmem [#allocation2], %s606
          %608 = dma.done %s604, 768
        $region44: #{tpu_custom_call.1} parent=39 // pred_fallthru
          _
      $region40: #{tpu_custom_call.1} parent=5 // pred_fallthru
        _
    $region6: #{tpu_custom_call.1} parent=1 // loop_footer
      %s16 = sadd.s32 1, %s12
    $region7: #{tpu_custom_call.1} parent=1 // loop_footer_branch
      %11 = sbr.rel target = $region3
    $region8: #{tpu_custom_call.1} parent=1 // loop_exit
      _
    %609 = vsyncpa [#allocation3], 1
    %s610 = scalar_lea.sflag [#allocation3], 1
    %611 = vsyncpa %s610, 1

</llo_original>
